<compile_context>
chip_gen: v6e
topology: v6e:2x2x1
jax: 0.10.0
libtpu: 0.0.40
codegen_flags: <defaults>
</compile_context>

<pallas_src>
import functools
import numpy as np
import jax
import jax.numpy as jnp
from jax import lax
from jax.experimental import pallas as pl
from jax.experimental.pallas import tpu as pltpu

LANE = 128  # TPU lane width; output is padded to this for lane-dense stores.


# ----------------------------- circuit glue (numpy) -----------------------------

def _rx(theta):
    c = np.cos(theta / 2.0)
    s = np.sin(theta / 2.0)
    return np.array([[c, -1j * s], [-1j * s, c]], dtype=np.complex64)


def _single_qubit_on(U2, wire, nq):
    mats = [np.eye(2, dtype=np.complex64)] * nq
    mats[wire] = U2
    out = mats[0]
    for m in mats[1:]:
        out = np.kron(out, m)
    return out


def _cnot(control, target, nq):
    dim = 2 ** nq
    U = np.zeros((dim, dim), dtype=np.complex64)
    for s in range(dim):
        cbit = (s >> (nq - 1 - control)) & 1
        t = s ^ (1 << (nq - 1 - target)) if cbit == 1 else s
        U[t, s] = 1.0
    return U


def build_entangler_unitary(weights, nq, nl):
    """BasicEntanglerLayers (RX rotations + CNOT ring) as a (2**nq, 2**nq) unitary."""
    w = np.asarray(weights, dtype=np.float64).reshape(nl, nq)
    dim = 2 ** nq
    W = np.eye(dim, dtype=np.complex64)
    for l in range(nl):
        for q in range(nq):
            W = _single_qubit_on(_rx(w[l, q]), q, nq) @ W
        if nq == 2:
            W = _cnot(0, 1, nq) @ W
        elif nq > 2:
            for q in range(nq):
                W = _cnot(q, (q + 1) % nq, nq) @ W
    return W


def build_z_signs(nq):
    """Z[s, q] = +1 / -1 : eigenvalue of PauliZ on wire q for basis state s."""
    dim = 2 ** nq
    Z = np.zeros((dim, nq), dtype=np.float32)
    for s in range(dim):
        for q in range(nq):
            bit = (s >> (nq - 1 - q)) & 1
            Z[s, q] = 1.0 - 2.0 * bit
    return Z


def build_packed_operands(W, Z, nq):
    """Host prep: packed complex unitary + lane-padded, doubled Z-sign matrix.

    w_packed (2d, 2d): [psi_re | psi_im] @ w_packed = [out_re | out_im]
    z_packed (2d, 128): (out_packed**2) @ z_packed == probs @ Z   (padded to 128 lanes)
    """
    dim = 2 ** nq
    w_packed = np.block([[W.real.T, W.imag.T],
                         [-W.imag.T, W.real.T]]).astype(np.float32)      # (2d, 2d)
    z_packed = np.zeros((2 * dim, LANE), np.float32)
    z_packed[:dim, :nq] = Z
    z_packed[dim:, :nq] = Z
    return jnp.asarray(w_packed), jnp.asarray(z_packed)


# ----------------------------- Pallas kernel (hot path) -----------------------------

def qlayer_kernel(x_ref, w_ref, z_ref, y_ref, *, nq):
    """Fused: RX angle embedding -> packed complex matmul -> |amp|^2 -> Z expvals."""
    dim = 2 ** nq
    tb = x_ref.shape[0]

    x = x_ref[...]                       # (TB, nq) angles
    c = jnp.cos(x * 0.5)                 # EUP
    s = jnp.sin(x * 0.5)

    # Build packed product state [psi_re | psi_im] directly at (TB, 2*dim).
    # amplitude(s) = prod_q [cos(x_q/2) if bit_q=0 else -i*sin(x_q/2)]
    #             = (prod of cos/sin magnitudes) * (-i)^popcount(s)
    col = lax.broadcasted_iota(jnp.int32, (tb, 2 * dim), 1)
    basis = col & (dim - 1)              # lane l -> basis state (l mod dim)
    mag = jnp.ones((tb, 2 * dim), jnp.float32)
    popcnt = jnp.zeros((tb, 2 * dim), jnp.int32)
    for q in range(nq):                  # nq is tiny & static -> fully unrolled VPU work
        bit = (basis >> (nq - 1 - q)) & 1
        popcnt = popcnt + bit
        mag = mag * jnp.where(bit == 1, s[:, q:q + 1], c[:, q:q + 1])
    k = popcnt & 3                       # phase (-i)^k : 1, -i, -1, i
    re_sign = jnp.where(k == 0, 1.0, jnp.where(k == 2, -1.0, 0.0))
    im_sign = jnp.where(k == 1, -1.0, jnp.where(k == 3, 1.0, 0.0))
    psi_packed = mag * jnp.where(col < dim, re_sign, im_sign)   # (TB, 2*dim)

    # One MXU matmul does the whole complex state propagation.
    out_packed = jnp.dot(psi_packed, w_ref[...],
                         preferred_element_type=jnp.float32)    # (TB, 2*dim)

    # probs @ Z == (out_re^2 + out_im^2) @ Z == (out_packed^2) @ [Z; Z]_padded
    y_ref[...] = jnp.dot(out_packed * out_packed, z_ref[...],
                         preferred_element_type=jnp.float32)    # (TB, 128) lane-dense


@functools.partial(jax.jit, static_argnames=("nq", "tb"))
def net_forward(x, w_packed, z_packed, nq, tb=512):
    """Forward pass of Net: x (B, nq) -> PauliZ expvals (B, nq)."""
    B = x.shape[0]
    dim = 2 ** nq

    # Batch tile: multiple of 8 sublanes, capped at `tb` rows (VMEM-friendly on
    # all of v5e/v6e/v7x: per-tile live footprint << 32 MiB scoped limit).
    TB = max(8, (min(tb, max(8, B)) // 8) * 8)
    Bp = pl.cdiv(B, TB) * TB
    x32 = x.astype(jnp.float32)
    if Bp != B:
        x32 = jnp.pad(x32, ((0, Bp - B), (0, 0)))

    kernel = functools.partial(qlayer_kernel, nq=nq)
    y = pl.pallas_call(
        kernel,
        out_shape=jax.ShapeDtypeStruct((Bp, LANE), jnp.float32),
        grid_spec=pltpu.PrefetchScalarGridSpec(
            num_scalar_prefetch=0,
            grid=(Bp // TB,),
            in_specs=[
                pl.BlockSpec((TB, nq), lambda i: (i, 0)),           # batch-tiled angles
                pl.BlockSpec((2 * dim, 2 * dim), lambda i: (0, 0)),  # VMEM-resident W
                pl.BlockSpec((2 * dim, LANE), lambda i: (0, 0)),     # VMEM-resident Z
            ],
            out_specs=pl.BlockSpec((TB, LANE), lambda i: (i, 0)),
        ),
        compiler_params=pltpu.CompilerParams(
            dimension_semantics=("parallel",)),   # batch axis -> 2 TCs on v7x
    )(x32, w_packed, z_packed)
    return y[:B, :nq]


# ----------------------------- reference & driver -----------------------------

def reference_numpy(x, W, Z, nq):
    """Pure numpy complex statevector simulation of the same circuit."""
    x = np.asarray(x, dtype=np.float64)
    B = x.shape[0]
    out = np.zeros((B, nq), dtype=np.float64)
    for b in range(B):
        psi = np.array([1.0 + 0j])
        for q in range(nq):
            c, s = np.cos(x[b, q] / 2.0), np.sin(x[b, q] / 2.0)
            psi = np.kron(psi, np.array([c, -1j * s]))
        psi = W.astype(np.complex128) @ psi
        probs = np.abs(psi) ** 2
        out[b] = probs @ Z.astype(np.float64)
    return out


if __name__ == "__main__":
    nq, nl = 4, 2        # number of qubits, number of entangler layers
    B = 8                # batch size

    # Deterministic inputs and weights (no checkpoint load).
    key = jax.random.PRNGKey(0)
    x = jax.random.uniform(key, (B, nq), dtype=jnp.float32,
                           minval=0.0, maxval=jnp.pi)
    weights = 0.1 * np.arange(nq * nl, dtype=np.float32)     # shape (nq*nl,)

    # Fixed circuit unitary (depends only on weights) and PauliZ sign matrix.
    W = build_entangler_unitary(weights, nq, nl)              # (2**nq, 2**nq) complex
    Z = build_z_signs(nq)                                     # (2**nq, nq)
    w_packed, z_packed = build_packed_operands(W, Z, nq)      # (2d, 2d), (2d, 128)

    y = net_forward(x, w_packed, z_packed, nq)
    y = jax.block_until_ready(y)

    y_ref = reference_numpy(np.asarray(x), W, Z, nq)
    np.testing.assert_allclose(np.asarray(y), y_ref, atol=1e-4, rtol=1e-4)

    # TODO(synk): the actual qnode is not provided by the spec; the canonical
    # TorchLayer circuit (AngleEmbedding + BasicEntanglerLayers + PauliZ) is used.
    print("KERNEL_OK")
</pallas_src>

<mosaic_0001>
module attributes {stable_mosaic.version = 11 : i64} {
  func.func @qlayer_kernel(%arg0: i32, %arg1: memref<8x4xf32, #tpu.memory_space<vmem>>, %arg2: memref<32x32xf32, #tpu.memory_space<vmem>>, %arg3: memref<32x128xf32, #tpu.memory_space<vmem>>, %arg4: memref<8x128xf32, #tpu.memory_space<vmem>>) attributes {dimension_semantics = [#tpu.dimension_semantics<parallel>], iteration_bounds = array<i64: 1>, scalar_prefetch = 0 : i64, scratch_operands = 0 : i64, tpu.core_type = #tpu.core_type<tc>, window_params = [{transform_indices = @transform_0, window_bounds = array<i64: 8, 4>}, {pipeline_mode = #tpu.pipeline_mode<synchronous>, transform_indices = @transform_1, window_bounds = array<i64: 32, 32>}, {pipeline_mode = #tpu.pipeline_mode<synchronous>, transform_indices = @transform_2, window_bounds = array<i64: 32, 128>}, {transform_indices = @transform_3, window_bounds = array<i64: 8, 128>}]} {
    %c0 = arith.constant 0 : index
    %c0_0 = arith.constant 0 : index
    %0 = vector.load %arg1[%c0, %c0_0] : memref<8x4xf32, #tpu.memory_space<vmem>>, vector<8x4xf32>
    %cst = arith.constant 5.000000e-01 : f32
    %1 = vector.broadcast %cst : f32 to vector<8x4xf32>
    %2 = arith.mulf %0, %1 : vector<8x4xf32>
    %3 = math.cos %2 : vector<8x4xf32>
    %cst_1 = arith.constant 5.000000e-01 : f32
    %4 = vector.broadcast %cst_1 : f32 to vector<8x4xf32>
    %5 = arith.mulf %0, %4 : vector<8x4xf32>
    %6 = math.sin %5 : vector<8x4xf32>
    %7 = tpu.iota {dimensions = array<i32: 1>} : vector<8x32xi32>
    %c15_i32 = arith.constant 15 : i32
    %8 = vector.broadcast %c15_i32 : i32 to vector<8x32xi32>
    %9 = arith.andi %7, %8 : vector<8x32xi32>
    %cst_2 = arith.constant 1.000000e+00 : f32
    %10 = vector.broadcast %cst_2 : f32 to vector<8x32xf32>
    %c0_i32 = arith.constant 0 : i32
    %11 = vector.broadcast %c0_i32 : i32 to vector<8x32xi32>
    %c3_i32 = arith.constant 3 : i32
    %12 = vector.broadcast %c3_i32 : i32 to vector<8x32xi32>
    %13 = arith.shrsi %9, %12 : vector<8x32xi32>
    %c1_i32 = arith.constant 1 : i32
    %14 = vector.broadcast %c1_i32 : i32 to vector<8x32xi32>
    %15 = arith.andi %13, %14 : vector<8x32xi32>
    %16 = arith.addi %11, %15 : vector<8x32xi32>
    %c1_i32_3 = arith.constant 1 : i32
    %17 = vector.broadcast %c1_i32_3 : i32 to vector<8x32xi32>
    %18 = arith.cmpi eq, %15, %17 : vector<8x32xi32>
    %19 = vector.extract_strided_slice %6 {offsets = [0, 0], sizes = [8, 1], strides = [1, 1]} : vector<8x4xf32> to vector<8x1xf32>
    %20 = vector.extract_strided_slice %3 {offsets = [0, 0], sizes = [8, 1], strides = [1, 1]} : vector<8x4xf32> to vector<8x1xf32>
    %21 = vector.shape_cast %19 : vector<8x1xf32> to vector<8x1xf32>
    %22 = vector.broadcast %21 : vector<8x1xf32> to vector<8x32xf32>
    %23 = vector.shape_cast %20 : vector<8x1xf32> to vector<8x1xf32>
    %24 = vector.broadcast %23 : vector<8x1xf32> to vector<8x32xf32>
    %25 = arith.select %18, %22, %24 : vector<8x32xi1>, vector<8x32xf32>
    %26 = arith.mulf %10, %25 : vector<8x32xf32>
    %c2_i32 = arith.constant 2 : i32
    %27 = vector.broadcast %c2_i32 : i32 to vector<8x32xi32>
    %28 = arith.shrsi %9, %27 : vector<8x32xi32>
    %c1_i32_4 = arith.constant 1 : i32
    %29 = vector.broadcast %c1_i32_4 : i32 to vector<8x32xi32>
    %30 = arith.andi %28, %29 : vector<8x32xi32>
    %31 = arith.addi %16, %30 : vector<8x32xi32>
    %c1_i32_5 = arith.constant 1 : i32
    %32 = vector.broadcast %c1_i32_5 : i32 to vector<8x32xi32>
    %33 = arith.cmpi eq, %30, %32 : vector<8x32xi32>
    %34 = vector.extract_strided_slice %6 {offsets = [0, 1], sizes = [8, 1], strides = [1, 1]} : vector<8x4xf32> to vector<8x1xf32>
    %35 = vector.extract_strided_slice %3 {offsets = [0, 1], sizes = [8, 1], strides = [1, 1]} : vector<8x4xf32> to vector<8x1xf32>
    %36 = vector.shape_cast %34 : vector<8x1xf32> to vector<8x1xf32>
    %37 = vector.broadcast %36 : vector<8x1xf32> to vector<8x32xf32>
    %38 = vector.shape_cast %35 : vector<8x1xf32> to vector<8x1xf32>
    %39 = vector.broadcast %38 : vector<8x1xf32> to vector<8x32xf32>
    %40 = arith.select %33, %37, %39 : vector<8x32xi1>, vector<8x32xf32>
    %41 = arith.mulf %26, %40 : vector<8x32xf32>
    %c1_i32_6 = arith.constant 1 : i32
    %42 = vector.broadcast %c1_i32_6 : i32 to vector<8x32xi32>
    %43 = arith.shrsi %9, %42 : vector<8x32xi32>
    %c1_i32_7 = arith.constant 1 : i32
    %44 = vector.broadcast %c1_i32_7 : i32 to vector<8x32xi32>
    %45 = arith.andi %43, %44 : vector<8x32xi32>
    %46 = arith.addi %31, %45 : vector<8x32xi32>
    %c1_i32_8 = arith.constant 1 : i32
    %47 = vector.broadcast %c1_i32_8 : i32 to vector<8x32xi32>
    %48 = arith.cmpi eq, %45, %47 : vector<8x32xi32>
    %49 = vector.extract_strided_slice %6 {offsets = [0, 2], sizes = [8, 1], strides = [1, 1]} : vector<8x4xf32> to vector<8x1xf32>
    %50 = vector.extract_strided_slice %3 {offsets = [0, 2], sizes = [8, 1], strides = [1, 1]} : vector<8x4xf32> to vector<8x1xf32>
    %51 = vector.shape_cast %49 : vector<8x1xf32> to vector<8x1xf32>
    %52 = vector.broadcast %51 : vector<8x1xf32> to vector<8x32xf32>
    %53 = vector.shape_cast %50 : vector<8x1xf32> to vector<8x1xf32>
    %54 = vector.broadcast %53 : vector<8x1xf32> to vector<8x32xf32>
    %55 = arith.select %48, %52, %54 : vector<8x32xi1>, vector<8x32xf32>
    %56 = arith.mulf %41, %55 : vector<8x32xf32>
    %c0_i32_9 = arith.constant 0 : i32
    %57 = vector.broadcast %c0_i32_9 : i32 to vector<8x32xi32>
    %58 = arith.shrsi %9, %57 : vector<8x32xi32>
    %c1_i32_10 = arith.constant 1 : i32
    %59 = vector.broadcast %c1_i32_10 : i32 to vector<8x32xi32>
    %60 = arith.andi %58, %59 : vector<8x32xi32>
    %61 = arith.addi %46, %60 : vector<8x32xi32>
    %c1_i32_11 = arith.constant 1 : i32
    %62 = vector.broadcast %c1_i32_11 : i32 to vector<8x32xi32>
    %63 = arith.cmpi eq, %60, %62 : vector<8x32xi32>
    %64 = vector.extract_strided_slice %6 {offsets = [0, 3], sizes = [8, 1], strides = [1, 1]} : vector<8x4xf32> to vector<8x1xf32>
    %65 = vector.extract_strided_slice %3 {offsets = [0, 3], sizes = [8, 1], strides = [1, 1]} : vector<8x4xf32> to vector<8x1xf32>
    %66 = vector.shape_cast %64 : vector<8x1xf32> to vector<8x1xf32>
    %67 = vector.broadcast %66 : vector<8x1xf32> to vector<8x32xf32>
    %68 = vector.shape_cast %65 : vector<8x1xf32> to vector<8x1xf32>
    %69 = vector.broadcast %68 : vector<8x1xf32> to vector<8x32xf32>
    %70 = arith.select %63, %67, %69 : vector<8x32xi1>, vector<8x32xf32>
    %71 = arith.mulf %56, %70 : vector<8x32xf32>
    %c3_i32_12 = arith.constant 3 : i32
    %72 = vector.broadcast %c3_i32_12 : i32 to vector<8x32xi32>
    %73 = arith.andi %61, %72 : vector<8x32xi32>
    %c0_i32_13 = arith.constant 0 : i32
    %74 = vector.broadcast %c0_i32_13 : i32 to vector<8x32xi32>
    %75 = arith.cmpi eq, %73, %74 : vector<8x32xi32>
    %c2_i32_14 = arith.constant 2 : i32
    %76 = vector.broadcast %c2_i32_14 : i32 to vector<8x32xi32>
    %77 = arith.cmpi eq, %73, %76 : vector<8x32xi32>
    %cst_15 = arith.constant -1.000000e+00 : f32
    %cst_16 = arith.constant 0.000000e+00 : f32
    %78 = vector.broadcast %cst_15 : f32 to vector<8x32xf32>
    %79 = vector.broadcast %cst_16 : f32 to vector<8x32xf32>
    %80 = arith.select %77, %78, %79 : vector<8x32xi1>, vector<8x32xf32>
    %cst_17 = arith.constant 1.000000e+00 : f32
    %81 = vector.broadcast %cst_17 : f32 to vector<8x32xf32>
    %82 = arith.select %75, %81, %80 : vector<8x32xi1>, vector<8x32xf32>
    %c1_i32_18 = arith.constant 1 : i32
    %83 = vector.broadcast %c1_i32_18 : i32 to vector<8x32xi32>
    %84 = arith.cmpi eq, %73, %83 : vector<8x32xi32>
    %c3_i32_19 = arith.constant 3 : i32
    %85 = vector.broadcast %c3_i32_19 : i32 to vector<8x32xi32>
    %86 = arith.cmpi eq, %73, %85 : vector<8x32xi32>
    %cst_20 = arith.constant 1.000000e+00 : f32
    %cst_21 = arith.constant 0.000000e+00 : f32
    %87 = vector.broadcast %cst_20 : f32 to vector<8x32xf32>
    %88 = vector.broadcast %cst_21 : f32 to vector<8x32xf32>
    %89 = arith.select %86, %87, %88 : vector<8x32xi1>, vector<8x32xf32>
    %cst_22 = arith.constant -1.000000e+00 : f32
    %90 = vector.broadcast %cst_22 : f32 to vector<8x32xf32>
    %91 = arith.select %84, %90, %89 : vector<8x32xi1>, vector<8x32xf32>
    %c16_i32 = arith.constant 16 : i32
    %92 = vector.broadcast %c16_i32 : i32 to vector<8x32xi32>
    %93 = arith.cmpi slt, %7, %92 : vector<8x32xi32>
    %94 = arith.select %93, %82, %91 : vector<8x32xi1>, vector<8x32xf32>
    %95 = arith.mulf %71, %94 : vector<8x32xf32>
    %c0_23 = arith.constant 0 : index
    %c0_24 = arith.constant 0 : index
    %96 = vector.load %arg2[%c0_23, %c0_24] : memref<32x32xf32, #tpu.memory_space<vmem>>, vector<32x32xf32>
    %cst_25 = arith.constant dense<0.000000e+00> : vector<8x32xf32>
    %97 = tpu.matmul %95, %96, %cst_25 {dimension_numbers = #tpu.dot_dimension_numbers<[1], [0], [0], [1], [0, 0, 1, 1], [], []>} : vector<8x32xf32>, vector<32x32xf32>, vector<8x32xf32> -> vector<8x32xf32>
    %98 = arith.mulf %97, %97 : vector<8x32xf32>
    %c0_26 = arith.constant 0 : index
    %c0_27 = arith.constant 0 : index
    %99 = vector.load %arg3[%c0_26, %c0_27] : memref<32x128xf32, #tpu.memory_space<vmem>>, vector<32x128xf32>
    %cst_28 = arith.constant dense<0.000000e+00> : vector<8x128xf32>
    %100 = tpu.matmul %98, %99, %cst_28 {dimension_numbers = #tpu.dot_dimension_numbers<[1], [0], [0], [1], [0, 0, 1, 1], [], []>} : vector<8x32xf32>, vector<32x128xf32>, vector<8x128xf32> -> vector<8x128xf32>
    %c0_29 = arith.constant 0 : index
    %c0_30 = arith.constant 0 : index
    %101 = vector.load %arg4[%c0_29, %c0_30] : memref<8x128xf32, #tpu.memory_space<vmem>>, vector<8x128xf32>
    tpu.vector_store %arg4[%c0_29, %c0_30], %100 {strides = array<i32>} : memref<8x128xf32, #tpu.memory_space<vmem>>, vector<8x128xf32>,
    return
  }
  func.func @transform_0(%arg0: i32) -> (i32, i32) {
    %c0_i32 = arith.constant 0 : i32
    %c0_i32_0 = arith.constant 0 : i32
    return %arg0, %c0_i32 : i32, i32
  }
  func.func @transform_1(%arg0: i32) -> (i32, i32) {
    %c0_i32 = arith.constant 0 : i32
    %c0_i32_0 = arith.constant 0 : i32
    %c0_i32_1 = arith.constant 0 : i32
    return %c0_i32, %c0_i32_0 : i32, i32
  }
  func.func @transform_2(%arg0: i32) -> (i32, i32) {
    %c0_i32 = arith.constant 0 : i32
    %c0_i32_0 = arith.constant 0 : i32
    %c0_i32_1 = arith.constant 0 : i32
    return %c0_i32, %c0_i32_0 : i32, i32
  }
  func.func @transform_3(%arg0: i32) -> (i32, i32) {
    %c0_i32 = arith.constant 0 : i32
    %c0_i32_0 = arith.constant 0 : i32
    return %arg0, %c0_i32 : i32, i32
  }
}

</mosaic_0001>

<llo_original>
// kernel: net_forward.1
$region0: #{net_forward.1}
  #allocation0 [shape = 'u32[]', space=smem, size = 0x4, offset = 0x4, fixed_abs, tag = 'smem constant byte address 0x4 - core index']
  #allocation1 [shape = 'u32[144,128]{1,0:T(1,128)}', space=vmem, size = 0x12000, scoped, tag = 'internal scratch']
  %s0 = inlined_call_operand.vmem [shape: f32[8,4], index: 0, kind: input, shape index: {}]
  %s1 = inlined_call_operand.hbm [shape: f32[32,32], index: 1, kind: input, shape index: {}]
  %s2 = inlined_call_operand.hbm [shape: f32[32,128], index: 2, kind: input, shape index: {}]
  %s3 = inlined_call_operand.vmem [shape: f32[8,128], index: 3, kind: output, shape index: {}]
  %s4 = sld [smem:[#allocation0]]
  $region30: #{net_forward.1} parent=0
    _
  %s6 = ssub.s32 1, %s4
  %s7 = scalar_select 0, %s6, %s4
  $region1: #{net_forward.1} parent=0
    #allocation2 [shape = 'u8[16384]{0}', space=vmem, size = 0x4000, scoped, tag = 'input window, operand 1, single buffered']
    #allocation3 [shape = 's32[1]{0}', space=sflag, size = 0x4, scoped, tag = 'scoped memory for net_forward.1']
    #allocation4 [shape = 'u8[16384]{0}', space=vmem, size = 0x4000, scoped, tag = 'input window, operand 2, single buffered']
    #allocation5 [shape = 's32[1]{0}', space=sflag, size = 0x4, scoped, tag = 'scoped memory for net_forward.1']
    %8 = vsyncpa [#allocation3], 0
    %9 = vsyncpa [#allocation5], 0
    // Predicated region
    $region2: #{net_forward.1} parent=1 // pred_check
      _
    $region3: #{net_forward.1} parent=1 // pred_check_branch
      %11 = sbr.rel (0) target = $region5
    $region4: #{net_forward.1} parent=1 // pred_region
      _
    $region5: #{net_forward.1} parent=1 // pred_fallthru
      _
    // Predicated region
    $region6: #{net_forward.1} parent=1 // pred_check
      _
    $region7: #{net_forward.1} parent=1 // pred_check_branch
      %13 = sbr.rel (0) target = $region9
    $region8: #{net_forward.1} parent=1 // pred_region
      %s15 = ssub.s32 512, 512
      %16 = vsyncadd [#allocation3], %s15
      %s17 = sshll.u32 [#allocation2], 4
      %s18 = int_to_ptr.vmem [resolvable:$true] %s17
      %23 = dma.hbm_to_vmem [thread:$0]  %s1, 512, %s18, [#allocation3], 128, 128, 8
    $region9: #{net_forward.1} parent=1 // pred_fallthru
      _
    // Predicated region
    $region10: #{net_forward.1} parent=1 // pred_check
      _
    $region11: #{net_forward.1} parent=1 // pred_check_branch
      %25 = sbr.rel (0) target = $region13
    $region12: #{net_forward.1} parent=1 // pred_region
      %s27 = ssub.s32 512, 512
      %28 = vsyncadd [#allocation5], %s27
      %s29 = sshll.u32 [#allocation4], 4
      %s30 = int_to_ptr.vmem [resolvable:$true] %s29
      %35 = dma.hbm_to_vmem [thread:$0]  %s2, 512, %s30, [#allocation5], 128, 128, 8
    $region13: #{net_forward.1} parent=1 // pred_fallthru
      _
    // Predicated region
    $region14: #{net_forward.1} parent=1 // pred_check
      _
    $region15: #{net_forward.1} parent=1 // pred_check_branch
      %37 = sbr.rel (0) target = $region17
    $region16: #{net_forward.1} parent=1 // pred_region
      %38 = dma.done [#allocation3], 512
    $region17: #{net_forward.1} parent=1 // pred_fallthru
      _
    // Predicated region
    $region18: #{net_forward.1} parent=1 // pred_check
      _
    $region19: #{net_forward.1} parent=1 // pred_check_branch
      %40 = sbr.rel (0) target = $region21
    $region20: #{net_forward.1} parent=1 // pred_region
      %41 = dma.done [#allocation5], 512
    $region21: #{net_forward.1} parent=1 // pred_fallthru
      _
    %v42 = vld [vmem:[%s0] sm:$0xff]
    %v43 = vmul.f32 %v42, 0.5
    %v44 = vand.u32 2147483647, %v43
    %vm45 = vcmp.le.f32.partialorder %v44, 0.7853982
    %vm46 = vcmp.lt.s32.totalorder %v43, 0
    %v47 = vand.u32 %v43, 2139095040
    %v48 = vshrl.u32 %v47, 23
    %v49 = vsub.s32 %v48, 127
    %v50 = vand.u32 2147483647, %v43
    %v51 = vand.u32 %v50, 8388607
    %v52 = vor.u32 %v51, 8388608
    %v53 = vsub.s32 0, %v52
    %v54 = vadd.s32 %v49, 1
    %vm55 = vcmp.gt.s32.totalorder %v54, 0
    %v56 = vsel %vm55, %v54, 0
    %v57 = vshrl.u32 %v56, 5
    %v58 = vand.u32 %v56, 31
    %v59 = vsub.s32 32, %v58
    %v60 = vshrl.u32 683565275, %v59
    %v61 = vshll.u32 683565275, %v58
    %v62 = vshrl.u32 2475754826, %v59
    %v63 = vor.u32 %v61, %v62
    %v64 = vshll.u32 2475754826, %v58
    %v65 = vshrl.u32 2131351028, %v59
    %v66 = vor.u32 %v64, %v65
    %v67 = vshll.u32 2131351028, %v58
    %v68 = vshrl.u32 2102212464, %v59
    %v69 = vor.u32 %v67, %v68
    %v70 = vshll.u32 2102212464, %v58
    %v71 = vshrl.u32 920167782, %v59
    %v72 = vor.u32 %v70, %v71
    %v73 = vshll.u32 920167782, %v58
    %v74 = vshrl.u32 1326507024, %v59
    %v75 = vor.u32 %v73, %v74
    %vm76 = vcmp.lt.s32.totalorder %v57, 1
    %vm77 = vcmp.lt.s32.totalorder %v57, 2
    %vm78 = vcmp.lt.s32.totalorder %v57, 3
    %vm79 = vcmp.lt.s32.totalorder %v57, 4
    %v80 = vsel %vm76, %v60, %v63
    %v81 = vsel %vm79, %v69, 2102212464
    %v82 = vsel %vm78, %v66, %v81
    %v83 = vsel %vm77, %v80, %v82
    %v84 = vsel %vm76, %v63, %v66
    %v85 = vsel %vm79, %v72, 920167782
    %v86 = vsel %vm78, %v69, %v85
    %v87 = vsel %vm77, %v84, %v86
    %v88 = vsel %vm76, %v66, %v69
    %v89 = vsel %vm79, %v75, 1326507024
    %v90 = vsel %vm78, %v72, %v89
    %v91 = vsel %vm77, %v88, %v90
    %v92 = vshll.u32 %v52, 8
    %v93 = vmul.u32.u64.compose %v92, %v91
    %v94 = vextract.low.u32 %v93
    %v95 = vextract.high.u32 %v93
    %v96 = vmul.u32.u64.compose %v92, %v87
    %v97 = vextract.low.u32 %v96
    %v98 = vextract.high.u32 %v96
    %v99 = vmul.u32 %v92, %v83
    %v100 = vadd.s32 %v95, %v97
    %vm101 = vc.u32 %v95, %v97
    %v102 = vadd.s32 %v98, 1
    %v103 = vsel %vm101, %v102, %v98
    %v104 = vadd.s32 %v99, %v103
    %v105 = vadd.s32 %v104, 536870912
    %v106 = vshrl.u32 %v105, 30
    %v107 = vshll.u32 %v106, 30
    %v108 = vsub.s32 %v104, %v107
    %vm109 = vcmp.lt.s32.totalorder %v108, 0
    %v110 = vsub.s32 0, %v108
    %v111 = vsel %vm109, %v110, %v108
    %v112 = vclz %v111
    %v113 = vsub.s32 %v112, 2
    %vm114 = vcmp.gt.s32.totalorder 0, %v113
    %v115 = vsel %vm114, 0, %v113
    %v116 = vsub.s32 32, %v115
    %v117 = vshll.u32 %v108, %v115
    %v118 = vshrl.u32 %v100, %v116
    %v119 = vor.u32 %v117, %v118
    %v120 = vsub.s32 4294967266, %v115
    %v121 = vadd.s32 %v120, 127
    %v122 = vshll.u32 %v121, 23
    %v123 = vor.u32 4788187, %v122
    %v124 = vand.u32 2147483647, %v123
    %v126 = vcvt.s32.f32 %v119
    %v127 = vmul.f32 %v126, %v124
    %v128 = vxor.u32 %v127, 2147483648
    %v129 = vsel %vm46, %v128, %v127
    %v130 = vsub.s32 4, %v106
    %v131 = vsel %vm46, %v130, %v106
    %v132 = vsel %vm45, %v43, %v129
    %v133 = vsel %vm45, 0, %v131
    %v134 = vcosq.f32.pop %v132
    %v135 = vsinq.f32.pop %v132
    %vm136 = vweird.f32 %v43
    %v137 = vand.u32 %v133, 3
    %vm138 = vcmp.lt.s32.totalorder %v137, 2
    %vm139 = vcmp.eq.s32.totalorder %v137, 0
    %v140 = vxor.u32 %v135, 2147483648
    %v141 = vsel %vm139, %v134, %v140
    %vm142 = vcmp.eq.s32.totalorder %v137, 2
    %v143 = vxor.u32 %v134, 2147483648
    %v144 = vsel %vm142, %v143, %v135
    %v145 = vsel %vm138, %v141, %v144
    %v146 = vsel %vm136, nan, %v145
    %v147 = vand.u32 2147483647, %v43
    %vm148 = vcmp.le.f32.partialorder %v147, 0.7853982
    %vm149 = vcmp.lt.s32.totalorder %v43, 0
    %v150 = vand.u32 %v43, 2139095040
    %v151 = vshrl.u32 %v150, 23
    %v152 = vsub.s32 %v151, 127
    %v153 = vand.u32 2147483647, %v43
    %v154 = vand.u32 %v153, 8388607
    %v155 = vor.u32 %v154, 8388608
    %v156 = vsub.s32 0, %v155
    %v157 = vadd.s32 %v152, 1
    %vm158 = vcmp.gt.s32.totalorder %v157, 0
    %v159 = vsel %vm158, %v157, 0
    %v160 = vshrl.u32 %v159, 5
    %v161 = vand.u32 %v159, 31
    %v162 = vsub.s32 32, %v161
    %v163 = vshrl.u32 683565275, %v162
    %v164 = vshll.u32 683565275, %v161
    %v165 = vshrl.u32 2475754826, %v162
    %v166 = vor.u32 %v164, %v165
    %v167 = vshll.u32 2475754826, %v161
    %v168 = vshrl.u32 2131351028, %v162
    %v169 = vor.u32 %v167, %v168
    %v170 = vshll.u32 2131351028, %v161
    %v171 = vshrl.u32 2102212464, %v162
    %v172 = vor.u32 %v170, %v171
    %v173 = vshll.u32 2102212464, %v161
    %v174 = vshrl.u32 920167782, %v162
    %v175 = vor.u32 %v173, %v174
    %v176 = vshll.u32 920167782, %v161
    %v177 = vshrl.u32 1326507024, %v162
    %v178 = vor.u32 %v176, %v177
    %vm179 = vcmp.lt.s32.totalorder %v160, 1
    %vm180 = vcmp.lt.s32.totalorder %v160, 2
    %vm181 = vcmp.lt.s32.totalorder %v160, 3
    %vm182 = vcmp.lt.s32.totalorder %v160, 4
    %v183 = vsel %vm179, %v163, %v166
    %v184 = vsel %vm182, %v172, 2102212464
    %v185 = vsel %vm181, %v169, %v184
    %v186 = vsel %vm180, %v183, %v185
    %v187 = vsel %vm179, %v166, %v169
    %v188 = vsel %vm182, %v175, 920167782
    %v189 = vsel %vm181, %v172, %v188
    %v190 = vsel %vm180, %v187, %v189
    %v191 = vsel %vm179, %v169, %v172
    %v192 = vsel %vm182, %v178, 1326507024
    %v193 = vsel %vm181, %v175, %v192
    %v194 = vsel %vm180, %v191, %v193
    %v195 = vshll.u32 %v155, 8
    %v196 = vmul.u32.u64.compose %v195, %v194
    %v197 = vextract.low.u32 %v196
    %v198 = vextract.high.u32 %v196
    %v199 = vmul.u32.u64.compose %v195, %v190
    %v200 = vextract.low.u32 %v199
    %v201 = vextract.high.u32 %v199
    %v202 = vmul.u32 %v195, %v186
    %v203 = vadd.s32 %v198, %v200
    %vm204 = vc.u32 %v198, %v200
    %v205 = vadd.s32 %v201, 1
    %v206 = vsel %vm204, %v205, %v201
    %v207 = vadd.s32 %v202, %v206
    %v208 = vadd.s32 %v207, 536870912
    %v209 = vshrl.u32 %v208, 30
    %v210 = vshll.u32 %v209, 30
    %v211 = vsub.s32 %v207, %v210
    %vm212 = vcmp.lt.s32.totalorder %v211, 0
    %v213 = vsub.s32 0, %v211
    %v214 = vsel %vm212, %v213, %v211
    %v215 = vclz %v214
    %v216 = vsub.s32 %v215, 2
    %vm217 = vcmp.gt.s32.totalorder 0, %v216
    %v218 = vsel %vm217, 0, %v216
    %v219 = vsub.s32 32, %v218
    %v220 = vshll.u32 %v211, %v218
    %v221 = vshrl.u32 %v203, %v219
    %v222 = vor.u32 %v220, %v221
    %v223 = vsub.s32 4294967266, %v218
    %v224 = vadd.s32 %v223, 127
    %v225 = vshll.u32 %v224, 23
    %v226 = vor.u32 4788187, %v225
    %v227 = vand.u32 2147483647, %v226
    %v229 = vcvt.s32.f32 %v222
    %v230 = vmul.f32 %v229, %v227
    %v231 = vxor.u32 %v230, 2147483648
    %v232 = vsel %vm149, %v231, %v230
    %v233 = vsub.s32 4, %v209
    %v234 = vsel %vm149, %v233, %v209
    %v235 = vsel %vm148, %v43, %v232
    %v236 = vsel %vm148, 0, %v234
    %v237 = vcosq.f32.pop %v235
    %v238 = vsinq.f32.pop %v235
    %vm239 = vweird.f32 %v43
    %v240 = vadd.s32 %v236, 3
    %v241 = vand.u32 %v240, 3
    %vm242 = vcmp.lt.s32.totalorder %v241, 2
    %vm243 = vcmp.eq.s32.totalorder %v241, 0
    %v244 = vxor.u32 %v238, 2147483648
    %v245 = vsel %vm243, %v237, %v244
    %vm246 = vcmp.eq.s32.totalorder %v241, 2
    %v247 = vxor.u32 %v237, 2147483648
    %v248 = vsel %vm246, %v247, %v238
    %v249 = vsel %vm242, %v245, %v248
    %v250 = vsel %vm239, nan, %v249
    %v251 = vlaneseq
    %v252 = vand.u32 %v251, 127
    %v253 = vand.u32 %v252, 15
    %v254 = vshra.s32 %v253, 3
    %v255 = vand.u32 %v254, 1
    %vm256 = vcmp.eq.s32.totalorder %v255, 1
    %258 = vset.pattern.permute.xlu0 0
    %259 = vperm.xlu0 %258, %v250
    %v260 = vpop.permute.xlu0 %259
    %263 = vset.pattern.permute.xlu0 0
    %264 = vperm.xlu0 %263, %v146
    %v265 = vpop.permute.xlu0 %264
    %v267 = vsel %vm256, %v260, %v265
    %v268 = vshra.s32 %v253, 2
    %v269 = vand.u32 %v268, 1
    %v270 = vadd.s32 %v255, %v269
    %vm271 = vcmp.eq.s32.totalorder %v269, 1
    %272 = vset.pattern.permute.xlu0 1
    %273 = vperm.xlu0 %272, %v250
    %v274 = vpop.permute.xlu0 %273
    %276 = vset.pattern.permute.xlu0 1
    %277 = vperm.xlu0 %276, %v146
    %v278 = vpop.permute.xlu0 %277
    %v280 = vsel %vm271, %v274, %v278
    %v281 = vmul.f32 %v267, %v280
    %v282 = vshra.s32 %v253, 1
    %v283 = vand.u32 %v282, 1
    %v284 = vadd.s32 %v270, %v283
    %vm285 = vcmp.eq.s32.totalorder %v283, 1
    %286 = vset.pattern.permute.xlu0 2
    %287 = vperm.xlu0 %286, %v250
    %v288 = vpop.permute.xlu0 %287
    %290 = vset.pattern.permute.xlu0 2
    %291 = vperm.xlu0 %290, %v146
    %v292 = vpop.permute.xlu0 %291
    %v294 = vsel %vm285, %v288, %v292
    %v295 = vmul.f32 %v281, %v294
    %v296 = vand.u32 %v253, 1
    %v297 = vadd.s32 %v284, %v296
    %vm298 = vcmp.eq.s32.totalorder %v296, 1
    %299 = vset.pattern.permute.xlu0 3
    %300 = vperm.xlu0 %299, %v250
    %v301 = vpop.permute.xlu0 %300
    %303 = vset.pattern.permute.xlu0 3
    %304 = vperm.xlu0 %303, %v146
    %v305 = vpop.permute.xlu0 %304
    %v307 = vsel %vm298, %v301, %v305
    %v308 = vmul.f32 %v295, %v307
    %v309 = vand.u32 %v297, 3
    %vm310 = vcmp.eq.s32.totalorder %v309, 0
    %vm311 = vcmp.eq.s32.totalorder %v309, 2
    %v312 = vsel %vm311, -1.0, 0.0
    %v313 = vsel %vm310, 1.0, %v312
    %vm314 = vcmp.eq.s32.totalorder %v309, 1
    %vm315 = vcmp.eq.s32.totalorder %v309, 3
    %v316 = vsel %vm315, 1.0, 0.0
    %v317 = vsel %vm314, -1.0, %v316
    %vm318 = vcmp.lt.s32.totalorder %v252, 16
    %v319 = vsel %vm318, %v313, %v317
    %v320 = vmul.f32 %v308, %v319
    %v321 = vld [vmem:[#allocation2] sm:$0xff]
    %v322 = vld [vmem:[#allocation2 + $0x8] sm:$0xff]
    %v323 = vld [vmem:[#allocation2 + $0x10] sm:$0xff]
    %v324 = vld [vmem:[#allocation2 + $0x18] sm:$0xff]
    %vm325 = vcmask 261120
    %v327 = vsel %vm325, %v320, 0
    %329 = vmatprep.subr.mxu0 0.0
    %330 = vmatpush1.msra.mxu0 0.0
    %331 = vmatprep.subr.mxu0 0.0
    %332 = vmatpush1.msra.mxu0 0.0
    %333 = vmatprep.subr.mxu0 0.0
    %334 = vmatpush1.msra.mxu0 0.0
    %335 = vmatprep.subr.mxu0 0.0
    %336 = vmatpush1.msra.mxu0 0.0
    %337 = vmatprep.subr.mxu0 0.0
    %338 = vmatpush1.msra.mxu0 0.0
    %339 = vmatprep.subr.mxu0 0.0
    %340 = vmatpush1.msra.mxu0 0.0
    %341 = vmatprep.subr.mxu0 0.0
    %342 = vmatpush1.msra.mxu0 0.0
    %343 = vmatprep.subr.mxu0 0.0
    %344 = vmatpush1.msra.mxu0 0.0
    %345 = vmatprep.subr.mxu0 0.0
    %346 = vmatpush1.msra.mxu0 0.0
    %347 = vmatprep.subr.mxu0 0.0
    %348 = vmatpush1.msra.mxu0 0.0
    %349 = vmatprep.subr.mxu0 0.0
    %350 = vmatpush1.msra.mxu0 0.0
    %351 = vmatprep.subr.mxu0 0.0
    %352 = vmatpush1.msra.mxu0 0.0
    %353 = vmatprep.subr.mxu0 0.0
    %354 = vmatpush1.msra.mxu0 %v324
    %355 = vmatprep.subr.mxu0 0.0
    %356 = vmatpush1.msra.mxu0 %v323
    %357 = vmatprep.subr.mxu0 0.0
    %358 = vmatpush1.msra.mxu0 %v322
    %359 = vmatprep.subr.mxu0 0.0
    %360 = vmatpush1.msra.mxu0 %v321
    %361 = vmatprep.subr.mxu0 0.0
    %362 = vmatpush2.msra.mxu0 0.0
    %363 = vmatprep.subr.mxu0 0.0
    %364 = vmatpush2.msra.mxu0 0.0
    %365 = vmatprep.subr.mxu0 0.0
    %366 = vmatpush2.msra.mxu0 0.0
    %367 = vmatprep.subr.mxu0 0.0
    %368 = vmatpush2.msra.mxu0 0.0
    %369 = vmatprep.subr.mxu0 0.0
    %370 = vmatpush2.msra.mxu0 0.0
    %371 = vmatprep.subr.mxu0 0.0
    %372 = vmatpush2.msra.mxu0 0.0
    %373 = vmatprep.subr.mxu0 0.0
    %374 = vmatpush2.msra.mxu0 0.0
    %375 = vmatprep.subr.mxu0 0.0
    %376 = vmatpush2.msra.mxu0 0.0
    %377 = vmatprep.subr.mxu0 0.0
    %378 = vmatpush2.msra.mxu0 0.0
    %379 = vmatprep.subr.mxu0 0.0
    %380 = vmatpush2.msra.mxu0 0.0
    %381 = vmatprep.subr.mxu0 0.0
    %382 = vmatpush2.msra.mxu0 0.0
    %383 = vmatprep.subr.mxu0 0.0
    %384 = vmatpush2.msra.mxu0 0.0
    %385 = vmatprep.subr.mxu0 0.0
    %386 = vmatpush2.msra.mxu0 0.0
    %387 = vmatprep.subr.mxu0 0.0
    %388 = vmatpush2.msra.mxu0 0.0
    %389 = vmatprep.subr.mxu0 0.0
    %390 = vmatpush2.msra.mxu0 0.0
    %391 = vmatprep.subr.mxu0 0.0
    %392 = vmatpush2.msra.mxu0 0.0
    %393 = vmatprep.mubr.f32.mxu0 0.0
    %394 = vmatmul.mubr.f32.gmra.mxu0 %v327
    %v395 = vpop.f32.mrf.mxu0
    %v396 = vadd.f32 0.0, %v395
    %v397 = vpop.f32.mrf.mxu0
    %398 = vdwg.mxu0
    %v399 = vmul.f32 %v396, %v396
    %v400 = vld [vmem:[#allocation4] sm:$0xff]
    %v401 = vld [vmem:[#allocation4 + $0x8] sm:$0xff]
    %v402 = vld [vmem:[#allocation4 + $0x10] sm:$0xff]
    %v403 = vld [vmem:[#allocation4 + $0x18] sm:$0xff]
    %v405 = vsel %vm325, %v399, 0
    %407 = vmatprep.subr.mxu0 0.0
    %408 = vmatpush1.msra.mxu0 0.0
    %409 = vmatprep.subr.mxu0 0.0
    %410 = vmatpush1.msra.mxu0 0.0
    %411 = vmatprep.subr.mxu0 0.0
    %412 = vmatpush1.msra.mxu0 0.0
    %413 = vmatprep.subr.mxu0 0.0
    %414 = vmatpush1.msra.mxu0 0.0
    %415 = vmatprep.subr.mxu0 0.0
    %416 = vmatpush1.msra.mxu0 0.0
    %417 = vmatprep.subr.mxu0 0.0
    %418 = vmatpush1.msra.mxu0 0.0
    %419 = vmatprep.subr.mxu0 0.0
    %420 = vmatpush1.msra.mxu0 0.0
    %421 = vmatprep.subr.mxu0 0.0
    %422 = vmatpush1.msra.mxu0 0.0
    %423 = vmatprep.subr.mxu0 0.0
    %424 = vmatpush1.msra.mxu0 0.0
    %425 = vmatprep.subr.mxu0 0.0
    %426 = vmatpush1.msra.mxu0 0.0
    %427 = vmatprep.subr.mxu0 0.0
    %428 = vmatpush1.msra.mxu0 0.0
    %429 = vmatprep.subr.mxu0 0.0
    %430 = vmatpush1.msra.mxu0 0.0
    %431 = vmatprep.subr.mxu0 0.0
    %432 = vmatpush1.msra.mxu0 %v403
    %433 = vmatprep.subr.mxu0 0.0
    %434 = vmatpush1.msra.mxu0 %v402
    %435 = vmatprep.subr.mxu0 0.0
    %436 = vmatpush1.msra.mxu0 %v401
    %437 = vmatprep.subr.mxu0 0.0
    %438 = vmatpush1.msra.mxu0 %v400
    %439 = vmatprep.subr.mxu0 0.0
    %440 = vmatpush2.msra.mxu0 0.0
    %441 = vmatprep.subr.mxu0 0.0
    %442 = vmatpush2.msra.mxu0 0.0
    %443 = vmatprep.subr.mxu0 0.0
    %444 = vmatpush2.msra.mxu0 0.0
    %445 = vmatprep.subr.mxu0 0.0
    %446 = vmatpush2.msra.mxu0 0.0
    %447 = vmatprep.subr.mxu0 0.0
    %448 = vmatpush2.msra.mxu0 0.0
    %449 = vmatprep.subr.mxu0 0.0
    %450 = vmatpush2.msra.mxu0 0.0
    %451 = vmatprep.subr.mxu0 0.0
    %452 = vmatpush2.msra.mxu0 0.0
    %453 = vmatprep.subr.mxu0 0.0
    %454 = vmatpush2.msra.mxu0 0.0
    %455 = vmatprep.subr.mxu0 0.0
    %456 = vmatpush2.msra.mxu0 0.0
    %457 = vmatprep.subr.mxu0 0.0
    %458 = vmatpush2.msra.mxu0 0.0
    %459 = vmatprep.subr.mxu0 0.0
    %460 = vmatpush2.msra.mxu0 0.0
    %461 = vmatprep.subr.mxu0 0.0
    %462 = vmatpush2.msra.mxu0 0.0
    %463 = vmatprep.subr.mxu0 0.0
    %464 = vmatpush2.msra.mxu0 0.0
    %465 = vmatprep.subr.mxu0 0.0
    %466 = vmatpush2.msra.mxu0 0.0
    %467 = vmatprep.subr.mxu0 0.0
    %468 = vmatpush2.msra.mxu0 0.0
    %469 = vmatprep.subr.mxu0 0.0
    %470 = vmatpush2.msra.mxu0 0.0
    %471 = vmatprep.mubr.f32.mxu0 0.0
    %472 = vmatmul.mubr.f32.gmra.mxu0 %v405
    %v473 = vpop.f32.mrf.mxu0
    %v474 = vadd.f32 0.0, %v473
    %v475 = vpop.f32.mrf.mxu0
    %476 = vdwg.mxu0
    %477 = vst [vmem:[%s3] sm:$0xff] %v474
    // Predicated region
    $region22: #{net_forward.1} parent=1 // pred_check
      _
    $region23: #{net_forward.1} parent=1 // pred_check_branch
      %479 = sbr.rel (0) target = $region25
    $region24: #{net_forward.1} parent=1 // pred_region
      _
    $region25: #{net_forward.1} parent=1 // pred_fallthru
      _
    // Predicated region
    $region26: #{net_forward.1} parent=1 // pred_check
      _
    $region27: #{net_forward.1} parent=1 // pred_check_branch
      %481 = sbr.rel (0) target = $region29
    $region28: #{net_forward.1} parent=1 // pred_region
      _
    $region29: #{net_forward.1} parent=1 // pred_fallthru
      _
    %482 = vsyncpa [#allocation3], 1
    %483 = vsyncpa [#allocation5], 1

</llo_original>
